<compile_context>
chip_gen: v7x
topology: tpu7x:2x2x1
jax: 0.10.0
libtpu: 0.0.40
codegen_flags: <defaults>
</compile_context>

<pallas_src>
import jax
import jax.numpy as jnp
from jax.experimental import pallas as pl
from jax.experimental.pallas import tpu as pltpu


def _pad_size(shift_directions):
    """Exact re-implementation of the arithmetic in SpatialShift2d.__init__."""
    cols = [list(c) for c in zip(*shift_directions)]
    (l, r), (t, b) = [
        [f(d) for f in (lambda a: abs(min(a + [0])), lambda b_: abs(max(*b_ + [0])))]
        for d in cols
    ]
    return [l, r, t, b]


def _copy_kernel(x_ref, o_ref):
    # Pure mem-bound copy: the pad+crop of the reference forward is an identity.
    o_ref[...] = x_ref[...]


def spatial_shift_2d(x, shift_directions=((1, 0), (-1, 0), (0, 1), (0, -1))):
    """Pallas implementation of SpatialShift2d.forward (identity copy).

    The replicate-pad + same-window-crop of the reference reduces to the
    identity, so we implement a lane-dense tiled HBM->HBM copy instead of
    materialising the padded intermediate.
    """
    del shift_directions  # pad sizes cancel out of the forward pass exactly.

    orig_shape = x.shape
    total = x.size
    LANES, SUBLANES = 128, 8

    if total % (LANES * SUBLANES) == 0:
        # Lane-dense path: view x as (rows, 128); rows is a multiple of 8.
        rows = total // LANES
        x2 = x.reshape(rows, LANES)

        itemsize = jnp.dtype(x.dtype).itemsize
        bytes_per_row = LANES * itemsize
        # ~4 MiB per input block -> double-buffered in+out ~= 16 MiB of VMEM,
        # safe on v5e/v6e (128 MiB) and v7x (64 MiB).
        target_rows = max(SUBLANES, (4 * 1024 * 1024) // bytes_per_row)
        block_rows = min(rows, target_rows)
        block_rows = max(SUBLANES, (block_rows // SUBLANES) * SUBLANES)

        grid = (pl.cdiv(rows, block_rows),)

        out2 = pl.pallas_call(
            _copy_kernel,
            out_shape=jax.ShapeDtypeStruct((rows, LANES), x.dtype),
            grid_spec=pltpu.PrefetchScalarGridSpec(
                num_scalar_prefetch=0,
                grid=grid,
                in_specs=[pl.BlockSpec((block_rows, LANES), lambda i: (i, 0))],
                out_specs=pl.BlockSpec((block_rows, LANES), lambda i: (i, 0)),
            ),
            compiler_params=pltpu.CompilerParams(
                dimension_semantics=("parallel",),
                vmem_limit_bytes=32 * 1024 * 1024,
            ),
        )(x2)
        return out2.reshape(orig_shape)

    # Fallback for element counts not divisible by 8*128: one batch-plane per
    # grid step with the full (C, H, W) block (block == full dims is always a
    # legal TPU block shape).
    N, C, H, W = orig_shape
    return pl.pallas_call(
        _copy_kernel,
        out_shape=jax.ShapeDtypeStruct(orig_shape, x.dtype),
        grid_spec=pltpu.PrefetchScalarGridSpec(
            num_scalar_prefetch=0,
            grid=(N,),
            in_specs=[pl.BlockSpec((1, C, H, W), lambda n: (n, 0, 0, 0))],
            out_specs=pl.BlockSpec((1, C, H, W), lambda n: (n, 0, 0, 0)),
        ),
        compiler_params=pltpu.CompilerParams(
            dimension_semantics=("parallel",),
        ),
    )(x)


def reference_forward(x, shift_directions=((1, 0), (-1, 0), (0, 1), (0, -1))):
    """Literal JAX transcription of SpatialShift2d.forward (for verification)."""
    shift_directions = [list(d) for d in shift_directions]
    l, r, t, b = _pad_size(shift_directions)
    nd = len(shift_directions)
    xp = jnp.pad(x, ((0, 0), (0, 0), (t, b), (l, r)), mode="edge")
    C = xp.shape[1]
    sections = [C // nd] * nd
    sections[-1] += C % nd
    h, w = xp.shape[2], xp.shape[3]
    outs, start = [], 0
    for sec, d in zip(sections, shift_directions):
        s = xp[:, start:start + sec]
        outs.append(s[:, :, t:h - b, l:w - r])
        start += sec
    return jnp.concatenate(outs, axis=1)


if __name__ == "__main__":
    # SpatialShift2d has no trainable parameters; only the input is needed.
    key = jax.random.PRNGKey(0)
    x = jax.random.normal(key, (2, 4, 16, 16), dtype=jnp.float32)

    y = spatial_shift_2d(x)
    y = jax.block_until_ready(y)

    y_ref = reference_forward(x)
    assert y.shape == y_ref.shape == x.shape
    assert y.dtype == x.dtype
    assert jnp.array_equal(y, y_ref), "Pallas kernel mismatch vs reference forward"
    print("KERNEL_OK")
</pallas_src>

<mosaic_0001>
module attributes {stable_mosaic.version = 11 : i64} {
  func.func @_copy_kernel(%arg0: i32, %arg1: memref<16x128xf32, #tpu.memory_space<vmem>>, %arg2: memref<16x128xf32, #tpu.memory_space<vmem>>) attributes {dimension_semantics = [#tpu.dimension_semantics<parallel>], iteration_bounds = array<i64: 1>, scalar_prefetch = 0 : i64, scratch_operands = 0 : i64, tpu.core_type = #tpu.core_type<tc>, window_params = [{transform_indices = @transform_0, window_bounds = array<i64: 16, 128>}, {transform_indices = @transform_1, window_bounds = array<i64: 16, 128>}]} {
    %c0 = arith.constant 0 : index
    %c0_0 = arith.constant 0 : index
    %0 = vector.load %arg1[%c0, %c0_0] : memref<16x128xf32, #tpu.memory_space<vmem>>, vector<16x128xf32>
    %c0_1 = arith.constant 0 : index
    %c0_2 = arith.constant 0 : index
    %1 = vector.load %arg2[%c0_1, %c0_2] : memref<16x128xf32, #tpu.memory_space<vmem>>, vector<16x128xf32>
    tpu.vector_store %arg2[%c0_1, %c0_2], %0 {strides = array<i32>} : memref<16x128xf32, #tpu.memory_space<vmem>>, vector<16x128xf32>,
    return
  }
  func.func @transform_0(%arg0: i32) -> (i32, i32) {
    %c0_i32 = arith.constant 0 : i32
    %c0_i32_0 = arith.constant 0 : i32
    return %arg0, %c0_i32 : i32, i32
  }
  func.func @transform_1(%arg0: i32) -> (i32, i32) {
    %c0_i32 = arith.constant 0 : i32
    %c0_i32_0 = arith.constant 0 : i32
    return %arg0, %c0_i32 : i32, i32
  }
}

</mosaic_0001>

<llo_original>
// kernel: tpu_custom_call.1
$region0: #{tpu_custom_call.1}
  #allocation0 [shape = 'u32[]', space=smem, size = 0x4, offset = 0x4, fixed_abs, tag = 'smem constant byte address 0x4 - core index']
  #allocation1 [shape = 'u32[144,128]{1,0:T(1,128)}', space=vmem, size = 0x12000, scoped, tag = 'internal scratch']
  %s0 = inlined_call_operand.hbm [shape: f32[16,128], index: 0, kind: input, shape index: {}]
  %s1 = inlined_call_operand.hbm [shape: f32[16,128], index: 1, kind: output, shape index: {}]
  %s2 = sld [smem:[#allocation0]]
  $region18: #{tpu_custom_call.1} parent=0
    _
  %s4 = ssub.s32 1, %s2
  %s5 = scalar_select 0, %s4, %s2
  $region1: #{tpu_custom_call.1} parent=0
    #allocation2 [shape = 'u8[8192]{0}', space=vmem, size = 0x2000, scoped, tag = 'input window, operand 0, single buffered']
    #allocation3 [shape = 's32[1]{0}', space=sflag, size = 0x4, scoped, tag = 'scoped memory for tpu_custom_call.1']
    #allocation4 [shape = 's32[1]{0}', space=sflag, size = 0x4, scoped, tag = 'scoped memory for tpu_custom_call.1']
    #allocation5 [shape = 'u8[8192]{0}', space=vmem, size = 0x2000, scoped, tag = 'output window, operand 0, single buffered']
    %6 = vsyncpa [#allocation3], 0
    %7 = vsyncpa [#allocation4], 0
    // Predicated region
    $region2: #{tpu_custom_call.1} parent=1 // pred_check
      _
    $region3: #{tpu_custom_call.1} parent=1 // pred_check_branch
      %9 = sbr.rel (0) target = $region5
    $region4: #{tpu_custom_call.1} parent=1 // pred_region
      %s11 = ssub.s32 256, 256
      %12 = vsyncadd [#allocation3], %s11
      %s13 = sshll.u32 [#allocation2], 4
      %s14 = int_to_ptr.vmem [resolvable:$true] %s13
      %19 = dma.hbm_to_vmem [thread:$0]  %s0, 256, %s14, [#allocation3], 128, 128, 8
    $region5: #{tpu_custom_call.1} parent=1 // pred_fallthru
      _
    // Predicated region
    $region6: #{tpu_custom_call.1} parent=1 // pred_check
      _
    $region7: #{tpu_custom_call.1} parent=1 // pred_check_branch
      %21 = sbr.rel (0) target = $region9
    $region8: #{tpu_custom_call.1} parent=1 // pred_region
      %22 = dma.done [#allocation3], 256
    $region9: #{tpu_custom_call.1} parent=1 // pred_fallthru
      _
    %v23 = vld [vmem:[#allocation2] sm:$0xff]
    %v24 = vld [vmem:[#allocation2 + $0x8] sm:$0xff]
    %25 = vst [vmem:[#allocation5] sm:$0xff] %v23
    %26 = vst [vmem:[#allocation5 + $0x8] sm:$0xff] %v24
    // Predicated region
    $region10: #{tpu_custom_call.1} parent=1 // pred_check
      _
    $region11: #{tpu_custom_call.1} parent=1 // pred_check_branch
      %28 = sbr.rel (0) target = $region13
    $region12: #{tpu_custom_call.1} parent=1 // pred_region
      %s30 = ssub.s32 256, 256
      %31 = vsyncadd [#allocation4], %s30
      %s32 = sshll.u32 [#allocation5], 4
      %s33 = int_to_ptr.vmem [resolvable:$true] %s32
      %38 = dma.vmem_to_hbm [thread:$0]  %s33, 256, %s1, [#allocation4], 128, 128, 8
    $region13: #{tpu_custom_call.1} parent=1 // pred_fallthru
      _
    // Predicated region
    $region14: #{tpu_custom_call.1} parent=1 // pred_check
      _
    $region15: #{tpu_custom_call.1} parent=1 // pred_check_branch
      %40 = sbr.rel (0) target = $region17
    $region16: #{tpu_custom_call.1} parent=1 // pred_region
      %41 = dma.done [#allocation4], 256
    $region17: #{tpu_custom_call.1} parent=1 // pred_fallthru
      _
    %42 = vsyncpa [#allocation3], 1
    %43 = vsyncpa [#allocation4], 1

</llo_original>
